<compile_context>
chip_gen: v5e
topology: v5e:2x2
jax: 0.10.0
libtpu: 0.0.40
codegen_flags: <defaults>
</compile_context>

<pallas_src>
import functools
import math

import jax
import jax.numpy as jnp
from jax import lax
from jax.experimental import pallas as pl
from jax.experimental.pallas import tpu as pltpu


def _round_up(x, m):
    return ((x + m - 1) // m) * m


def _pick_tile(total, target, mult):
    """Largest multiple of `mult` that divides `total`, capped at `target` (>= mult).

    Callers guarantee total % mult == 0, so `mult` itself is always a valid fallback.
    """
    target = max(target, mult)
    if total <= target:
        return total
    best = mult
    t = mult
    while t <= target:
        if total % t == 0:
            best = t
        t += mult
    return best


def siam_kernel(r_ref, x_ref, w1_ref, b1_ref, w2_ref, b2_ref,
                rep_ref, emb_ref, acc_ref):
    """Grid = (M tiles, K tiles). K (backbone reduction) is the last, 'arbitrary' axis."""
    k = pl.program_id(1)
    nk = pl.num_programs(1)

    @pl.when(k == 0)
    def _():
        acc_ref[...] = jnp.zeros_like(acc_ref)

    # backbone matmul partial sum: bf16 x bf16 -> f32 accumulate on the MXU
    acc_ref[...] += jnp.dot(x_ref[...], w1_ref[...],
                            preferred_element_type=jnp.float32)

    @pl.when(k == nk - 1)
    def _():
        r_up = r_ref[0, 0]

        # backbone epilogue: bias + ReLU (f32)
        rep = jnp.maximum(acc_ref[...] + b1_ref[...], 0.0)
        rep_ref[...] = rep.astype(rep_ref.dtype)

        # projector: Linear, bf16 operands, f32 accumulate + f32 bias
        emb = jnp.dot(rep.astype(jnp.bfloat16), w2_ref[...],
                      preferred_element_type=jnp.float32) + b2_ref[...]

        # normalize(emb, r_up, 'l2_ball'):
        #   mask = (||emb|| < r_up); out = mask*emb + (1-mask)*r_up*F.normalize(emb)
        # Implemented as norm^2 compare + rsqrt (EUP) instead of sqrt + divide.
        # rsqrt(max(nsq, 1e-24)) == 1 / max(norm, 1e-12), matching F.normalize's eps.
        nsq = jnp.sum(emb * emb, axis=-1, keepdims=True)          # [tm, 1]
        inv_norm = lax.rsqrt(jnp.maximum(nsq, 1e-24))
        inside = nsq < (r_up * r_up)
        emb_ref[...] = jnp.where(inside, emb, r_up * emb * inv_norm).astype(emb_ref.dtype)


def prepare_params(w1, b1, w2, b2):
    """One-time weight preparation (do this OUTSIDE the hot path and cache the result).

    Casts the matmul operands to bf16 and pads w1's K dim to a multiple of 128 only if
    needed.  No per-call weight copies are made inside siam_forward.
    """
    in_dim, rep_dim = w1.shape
    emb_dim = w2.shape[1]
    k_pad = _round_up(in_dim, 128)
    w1p = w1.astype(jnp.bfloat16)
    if k_pad != in_dim:
        w1p = jnp.pad(w1p, ((0, k_pad - in_dim), (0, 0)))
    return (w1p,
            b1.reshape(1, rep_dim).astype(jnp.float32),
            w2.astype(jnp.bfloat16),
            b2.reshape(1, emb_dim).astype(jnp.float32))


def siam_forward(z1, z2, prepared, mu=1.0):
    """Returns (f1_rep, f1_emb, f2_rep, f2_emb) like SiamNetwork.forward(z1, z2)."""
    w1p, b1, w2, b2 = prepared
    K_pad, rep_dim = w1p.shape
    emb_dim = w2.shape[1]

    B = z1.shape[0]
    in_dim = 1
    for d in z1.shape[1:]:
        in_dim *= d
    M = 2 * B                                     # torch.cat([z1, z2], dim=0)

    # --- M geometry: big tiles (w1 is re-streamed per M tile), but keep >=2 parallel
    # tiles when possible so both v7x TensorCores are used. ---------------------------
    M_pad = _round_up(M, 8)
    if M_pad < 16:
        tm = M_pad
    else:
        tm = _pick_tile(M_pad, 512, 8)
        if tm == M_pad:
            tm = _pick_tile(M_pad, M_pad // 2, 8)
    num_m = M_pad // tm

    # --- K geometry: tile size from a VMEM budget that also fits v7x (64 MiB VMEM) ---
    per_k_bytes = 4 * (tm + rep_dim)              # double-buffered bf16 x tile + w1 slab
    fixed_bytes = (tm * rep_dim * 4                           # f32 accumulator
                   + 2 * tm * (rep_dim + emb_dim) * 4         # double-buffered outputs
                   + 2 * (rep_dim * emb_dim * 2               # w2 (bf16) buffers
                          + (rep_dim + emb_dim) * 4))         # b1/b2 buffers
    budget = 40 * 1024 * 1024
    tk_target = max(128, min(2048, (budget - fixed_bytes) // max(per_k_bytes, 1)))
    tk = _pick_tile(K_pad, tk_target, 128)
    num_k = K_pad // tk

    # --- activations: flatten + two-view concat (bf16); pad only when required -------
    x = jnp.concatenate([z1.reshape(B, -1), z2.reshape(B, -1)],
                        axis=0).astype(jnp.bfloat16)
    if M_pad != M or K_pad != in_dim:
        x = jnp.pad(x, ((0, M_pad - M), (0, K_pad - in_dim)))

    r_up = jnp.sqrt(jnp.asarray(mu, jnp.float32)).reshape(1, 1)

    smem_spec = pl.BlockSpec(memory_space=pltpu.MemorySpace.SMEM)

    cost = pl.CostEstimate(
        flops=2 * M_pad * K_pad * rep_dim + 2 * M_pad * rep_dim * emb_dim,
        transcendentals=M_pad,
        bytes_accessed=(M_pad * K_pad * 2                            # x streamed once
                        + num_m * K_pad * rep_dim * 2                # w1 per M tile
                        + num_m * (rep_dim * emb_dim * 2
                                   + (rep_dim + emb_dim) * 4)        # w2/b1/b2 per M tile
                        + M_pad * (rep_dim + emb_dim) * 4),          # outputs
    )

    rep, emb = pl.pallas_call(
        siam_kernel,
        out_shape=(
            jax.ShapeDtypeStruct((M_pad, rep_dim), jnp.float32),
            jax.ShapeDtypeStruct((M_pad, emb_dim), jnp.float32),
        ),
        grid_spec=pltpu.PrefetchScalarGridSpec(
            num_scalar_prefetch=0,
            grid=(num_m, num_k),
            in_specs=[
                smem_spec,                                              # r_up scalar
                pl.BlockSpec((tm, tk), lambda i, k: (i, k)),            # x tile (bf16)
                pl.BlockSpec((tk, rep_dim), lambda i, k: (k, 0)),       # w1 K-slab, native N
                pl.BlockSpec((1, rep_dim), lambda i, k: (0, 0)),        # b1 (f32)
                pl.BlockSpec((rep_dim, emb_dim), lambda i, k: (0, 0)),  # w2 (bf16)
                pl.BlockSpec((1, emb_dim), lambda i, k: (0, 0)),        # b2 (f32)
            ],
            out_specs=(
                pl.BlockSpec((tm, rep_dim), lambda i, k: (i, 0)),       # rep (resident over k)
                pl.BlockSpec((tm, emb_dim), lambda i, k: (i, 0)),       # emb (resident over k)
            ),
            scratch_shapes=[pltpu.VMEM((tm, rep_dim), jnp.float32)],
        ),
        compiler_params=pltpu.CompilerParams(
            dimension_semantics=("parallel", "arbitrary"),
            # <= 48 MiB keeps the working set safely inside v7x's 64 MiB physical VMEM;
            # v5e/v6e have 128 MiB physical, so this is conservative there.
            vmem_limit_bytes=48 * 1024 * 1024,
        ),
        cost_estimate=cost,
    )(r_up, x, w1p, b1, w2, b2)

    rep = rep[:M, :]
    emb = emb[:M, :]

    # chunk(2, dim=0)
    f1_rep, f2_rep = jnp.split(rep, 2, axis=0)
    f1_emb, f2_emb = jnp.split(emb, 2, axis=0)
    return f1_rep, f1_emb, f2_rep, f2_emb


def init_params(key, in_dim, rep_dim, emb_dim):
    k1, k2, k3, k4 = jax.random.split(key, 4)
    w1 = jax.random.normal(k1, (in_dim, rep_dim), jnp.float32) * (1.0 / math.sqrt(in_dim))
    b1 = jax.random.normal(k2, (1, rep_dim), jnp.float32) * 0.01
    w2 = jax.random.normal(k3, (rep_dim, emb_dim), jnp.float32) * (1.0 / math.sqrt(rep_dim))
    b2 = jax.random.normal(k4, (1, emb_dim), jnp.float32) * 0.01
    return w1, b1, w2, b2


def _reference(z1, z2, params, mu=1.0):
    """Pure-JAX reference using the same bf16-rounded operands (checks kernel math)."""
    w1, b1, w2, b2 = params
    r_up = math.sqrt(mu)
    B = z1.shape[0]
    x = jnp.concatenate([z1, z2], axis=0).reshape(2 * B, -1)
    x = x.astype(jnp.bfloat16).astype(jnp.float32)
    w1f = w1.astype(jnp.bfloat16).astype(jnp.float32)
    rep = jnp.maximum(x @ w1f + b1, 0.0)
    rep_bf = rep.astype(jnp.bfloat16).astype(jnp.float32)
    w2f = w2.astype(jnp.bfloat16).astype(jnp.float32)
    emb = rep_bf @ w2f + b2
    norm = jnp.sqrt(jnp.sum(emb * emb, axis=-1, keepdims=True))
    mask = (norm < r_up).astype(jnp.float32)
    unit = emb / jnp.maximum(norm, 1e-12)
    emb = mask * emb + (1.0 - mask) * r_up * unit
    f1_rep, f2_rep = jnp.split(rep, 2, axis=0)
    f1_emb, f2_emb = jnp.split(emb, 2, axis=0)
    return f1_rep, f1_emb, f2_rep, f2_emb


if __name__ == "__main__":
    # Small shapes: batch=2 per view, channels=4, spatial=16x16, rep=32, emb=32.
    B, C, H, W = 2, 4, 16, 16
    REP, EMB = 32, 32
    in_dim = C * H * W

    key = jax.random.PRNGKey(0)
    kz1, kz2, kp = jax.random.split(key, 3)
    z1 = jax.random.normal(kz1, (B, C, H, W), jnp.float32)
    z2 = jax.random.normal(kz2, (B, C, H, W), jnp.float32)
    params = init_params(kp, in_dim, REP, EMB)

    # One-time weight preparation (outside the hot path).
    prepared = jax.block_until_ready(prepare_params(*params))

    fwd = jax.jit(functools.partial(siam_forward, mu=1.0))
    outs = fwd(z1, z2, prepared)
    jax.block_until_ready(outs)
    f1_rep, f1_emb, f2_rep, f2_emb = outs

    assert f1_rep.shape == (B, REP) and f2_rep.shape == (B, REP)
    assert f1_emb.shape == (B, EMB) and f2_emb.shape == (B, EMB)

    refs = _reference(z1, z2, params, mu=1.0)
    for got, ref in zip(outs, refs):
        assert bool(jnp.all(jnp.isfinite(got)))
        assert bool(jnp.allclose(got, ref, rtol=5e-3, atol=5e-3))

    # TODO(synk): classification head path (online_head_rep/emb/trunc) and the
    # separation / batch_l2norm running-statistics branches are training-state
    # dependent and not exercised in this default forward configuration.
    print("KERNEL_OK")
</pallas_src>

<mosaic_0001>
module attributes {stable_mosaic.version = 11 : i64} {
  func.func @siam_kernel(%arg0: i32, %arg1: i32, %arg2: memref<1x1xf32, #tpu.memory_space<smem>>, %arg3: memref<8x1024xbf16, #tpu.memory_space<vmem>>, %arg4: memref<1024x32xbf16, #tpu.memory_space<vmem>>, %arg5: memref<1x32xf32, #tpu.memory_space<vmem>>, %arg6: memref<32x32xbf16, #tpu.memory_space<vmem>>, %arg7: memref<1x32xf32, #tpu.memory_space<vmem>>, %arg8: memref<8x32xf32, #tpu.memory_space<vmem>>, %arg9: memref<8x32xf32, #tpu.memory_space<vmem>>, %arg10: memref<8x32xf32, #tpu.memory_space<vmem>>) attributes {dimension_semantics = [#tpu.dimension_semantics<parallel>, #tpu.dimension_semantics<arbitrary>], iteration_bounds = array<i64: 1, 1>, scalar_prefetch = 0 : i64, scratch_operands = 1 : i64, tpu.core_type = #tpu.core_type<tc>, window_params = [{transform_indices = @transform_0, window_bounds = array<i64: 1, 1>}, {transform_indices = @transform_1, window_bounds = array<i64: 8, 1024>}, {transform_indices = @transform_2, window_bounds = array<i64: 1024, 32>}, {pipeline_mode = #tpu.pipeline_mode<synchronous>, transform_indices = @transform_3, window_bounds = array<i64: 1, 32>}, {pipeline_mode = #tpu.pipeline_mode<synchronous>, transform_indices = @transform_4, window_bounds = array<i64: 32, 32>}, {pipeline_mode = #tpu.pipeline_mode<synchronous>, transform_indices = @transform_5, window_bounds = array<i64: 1, 32>}, {transform_indices = @transform_6, window_bounds = array<i64: 8, 32>}, {transform_indices = @transform_7, window_bounds = array<i64: 8, 32>}]} {
    %c0_i32 = arith.constant 0 : i32
    %0 = arith.cmpi eq, %arg1, %c0_i32 : i32
    %1 = arith.extui %0 : i1 to i32
    %c0_i32_0 = arith.constant 0 : i32
    %2 = arith.cmpi ne, %1, %c0_i32_0 : i32
    scf.if %2 {
      %cst_10 = arith.constant 0.000000e+00 : f32
      %12 = vector.broadcast %cst_10 : f32 to vector<8x32xf32>
      %c0_11 = arith.constant 0 : index
      %c0_12 = arith.constant 0 : index
      %13 = vector.load %arg10[%c0_11, %c0_12] : memref<8x32xf32, #tpu.memory_space<vmem>>, vector<8x32xf32>
      tpu.vector_store %arg10[%c0_11, %c0_12], %12 {strides = array<i32>} : memref<8x32xf32, #tpu.memory_space<vmem>>, vector<8x32xf32>,
    } else {
    }
    %c0 = arith.constant 0 : index
    %c0_1 = arith.constant 0 : index
    %3 = vector.load %arg10[%c0, %c0_1] : memref<8x32xf32, #tpu.memory_space<vmem>>, vector<8x32xf32>
    %c0_2 = arith.constant 0 : index
    %c0_3 = arith.constant 0 : index
    %4 = vector.load %arg3[%c0_2, %c0_3] : memref<8x1024xbf16, #tpu.memory_space<vmem>>, vector<8x1024xbf16>
    %c0_4 = arith.constant 0 : index
    %c0_5 = arith.constant 0 : index
    %5 = vector.load %arg4[%c0_4, %c0_5] : memref<1024x32xbf16, #tpu.memory_space<vmem>>, vector<1024x32xbf16>
    %cst = arith.constant dense<0.000000e+00> : vector<8x32xf32>
    %6 = tpu.matmul %4, %5, %cst {dimension_numbers = #tpu.dot_dimension_numbers<[1], [0], [0], [1], [0, 0, 1, 1], [], []>} : vector<8x1024xbf16>, vector<1024x32xbf16>, vector<8x32xf32> -> vector<8x32xf32>
    %7 = arith.addf %3, %6 : vector<8x32xf32>
    %c0_6 = arith.constant 0 : index
    %c0_7 = arith.constant 0 : index
    %8 = vector.load %arg10[%c0_6, %c0_7] : memref<8x32xf32, #tpu.memory_space<vmem>>, vector<8x32xf32>
    tpu.vector_store %arg10[%c0_6, %c0_7], %7 {strides = array<i32>} : memref<8x32xf32, #tpu.memory_space<vmem>>, vector<8x32xf32>,
    %c0_i32_8 = arith.constant 0 : i32
    %9 = arith.cmpi eq, %arg1, %c0_i32_8 : i32
    %10 = arith.extui %9 : i1 to i32
    %c0_i32_9 = arith.constant 0 : i32
    %11 = arith.cmpi ne, %10, %c0_i32_9 : i32
    scf.if %11 {
      %c0_10 = arith.constant 0 : index
      %c0_11 = arith.constant 0 : index
      %12 = memref.load %arg2[%c0_10, %c0_11] : memref<1x1xf32, #tpu.memory_space<smem>>
      %c0_12 = arith.constant 0 : index
      %c0_13 = arith.constant 0 : index
      %13 = vector.load %arg10[%c0_12, %c0_13] : memref<8x32xf32, #tpu.memory_space<vmem>>, vector<8x32xf32>
      %c0_14 = arith.constant 0 : index
      %c0_15 = arith.constant 0 : index
      %14 = vector.load %arg5[%c0_14, %c0_15] : memref<1x32xf32, #tpu.memory_space<vmem>>, vector<1x32xf32>
      %15 = vector.broadcast %14 : vector<1x32xf32> to vector<8x32xf32>
      %16 = arith.addf %13, %15 : vector<8x32xf32>
      %cst_16 = arith.constant 0.000000e+00 : f32
      %17 = vector.broadcast %cst_16 : f32 to vector<8x32xf32>
      %18 = arith.maximumf %16, %17 : vector<8x32xf32>
      %c0_17 = arith.constant 0 : index
      %c0_18 = arith.constant 0 : index
      %19 = vector.load %arg8[%c0_17, %c0_18] : memref<8x32xf32, #tpu.memory_space<vmem>>, vector<8x32xf32>
      tpu.vector_store %arg8[%c0_17, %c0_18], %18 {strides = array<i32>} : memref<8x32xf32, #tpu.memory_space<vmem>>, vector<8x32xf32>,
      %20 = arith.truncf %18 : vector<8x32xf32> to vector<8x32xbf16>
      %c0_19 = arith.constant 0 : index
      %c0_20 = arith.constant 0 : index
      %21 = vector.load %arg6[%c0_19, %c0_20] : memref<32x32xbf16, #tpu.memory_space<vmem>>, vector<32x32xbf16>
      %cst_21 = arith.constant dense<0.000000e+00> : vector<8x32xf32>
      %22 = tpu.matmul %20, %21, %cst_21 {dimension_numbers = #tpu.dot_dimension_numbers<[1], [0], [0], [1], [0, 0, 1, 1], [], []>} : vector<8x32xbf16>, vector<32x32xbf16>, vector<8x32xf32> -> vector<8x32xf32>
      %c0_22 = arith.constant 0 : index
      %c0_23 = arith.constant 0 : index
      %23 = vector.load %arg7[%c0_22, %c0_23] : memref<1x32xf32, #tpu.memory_space<vmem>>, vector<1x32xf32>
      %24 = vector.broadcast %23 : vector<1x32xf32> to vector<8x32xf32>
      %25 = arith.addf %22, %24 : vector<8x32xf32>
      %26 = arith.mulf %25, %25 : vector<8x32xf32>
      %cst_24 = arith.constant dense<0.000000e+00> : vector<8xf32>
      %27 = vector.multi_reduction <add>, %26, %cst_24 [1] : vector<8x32xf32> to vector<8xf32>
      %28 = vector.shape_cast %27 : vector<8xf32> to vector<8x1xf32>
      %cst_25 = arith.constant 1.000000e-24 : f32
      %29 = vector.broadcast %cst_25 : f32 to vector<8x1xf32>
      %30 = arith.maximumf %28, %29 : vector<8x1xf32>
      %31 = math.rsqrt %30 : vector<8x1xf32>
      %32 = arith.mulf %12, %12 : f32
      %33 = vector.broadcast %32 : f32 to vector<8x1xf32>
      %34 = arith.cmpf olt, %28, %33 : vector<8x1xf32>
      %35 = vector.broadcast %12 : f32 to vector<8x32xf32>
      %36 = arith.mulf %35, %25 : vector<8x32xf32>
      %37 = vector.broadcast %31 : vector<8x1xf32> to vector<8x32xf32>
      %38 = arith.mulf %36, %37 : vector<8x32xf32>
      %39 = vector.shape_cast %34 : vector<8x1xi1> to vector<8x1xi1>
      %40 = vector.broadcast %39 : vector<8x1xi1> to vector<8x32xi1>
      %41 = arith.select %40, %25, %38 : vector<8x32xi1>, vector<8x32xf32>
      %c0_26 = arith.constant 0 : index
      %c0_27 = arith.constant 0 : index
      %42 = vector.load %arg9[%c0_26, %c0_27] : memref<8x32xf32, #tpu.memory_space<vmem>>, vector<8x32xf32>
      tpu.vector_store %arg9[%c0_26, %c0_27], %41 {strides = array<i32>} : memref<8x32xf32, #tpu.memory_space<vmem>>, vector<8x32xf32>,
    } else {
    }
    return
  }
  func.func @transform_0(%arg0: i32, %arg1: i32) -> (i32, i32) {
    %c0_i32 = arith.constant 0 : i32
    %c0_i32_0 = arith.constant 0 : i32
    %c0_i32_1 = arith.constant 0 : i32
    return %c0_i32, %c0_i32_0 : i32, i32
  }
  func.func @transform_1(%arg0: i32, %arg1: i32) -> (i32, i32) {
    %c0_i32 = arith.constant 0 : i32
    return %arg0, %arg1 : i32, i32
  }
  func.func @transform_2(%arg0: i32, %arg1: i32) -> (i32, i32) {
    %c0_i32 = arith.constant 0 : i32
    %c0_i32_0 = arith.constant 0 : i32
    return %arg1, %c0_i32 : i32, i32
  }
  func.func @transform_3(%arg0: i32, %arg1: i32) -> (i32, i32) {
    %c0_i32 = arith.constant 0 : i32
    %c0_i32_0 = arith.constant 0 : i32
    %c0_i32_1 = arith.constant 0 : i32
    return %c0_i32, %c0_i32_0 : i32, i32
  }
  func.func @transform_4(%arg0: i32, %arg1: i32) -> (i32, i32) {
    %c0_i32 = arith.constant 0 : i32
    %c0_i32_0 = arith.constant 0 : i32
    %c0_i32_1 = arith.constant 0 : i32
    return %c0_i32, %c0_i32_0 : i32, i32
  }
  func.func @transform_5(%arg0: i32, %arg1: i32) -> (i32, i32) {
    %c0_i32 = arith.constant 0 : i32
    %c0_i32_0 = arith.constant 0 : i32
    %c0_i32_1 = arith.constant 0 : i32
    return %c0_i32, %c0_i32_0 : i32, i32
  }
  func.func @transform_6(%arg0: i32, %arg1: i32) -> (i32, i32) {
    %c0_i32 = arith.constant 0 : i32
    %c0_i32_0 = arith.constant 0 : i32
    return %arg0, %c0_i32 : i32, i32
  }
  func.func @transform_7(%arg0: i32, %arg1: i32) -> (i32, i32) {
    %c0_i32 = arith.constant 0 : i32
    %c0_i32_0 = arith.constant 0 : i32
    return %arg0, %c0_i32 : i32, i32
  }
}

</mosaic_0001>

<llo_original>
// kernel: siam_forward.1
$region0: #{siam_forward.1}
  #allocation0 [shape = 'u32[]', space=smem, size = 0x4, offset = 0x4, fixed_abs, tag = 'smem constant byte address 0x4 - core index']
  #allocation1 [shape = 'u32[72,128]{1,0:T(1,128)}', space=vmem, size = 0x9000, scoped, tag = 'internal scratch']
  #allocation2 [shape = 'f32[8,32]{1,0:T(8,128)}', space=vmem, size = 0x1000, scoped, tag = 'scratch operand']
  #allocation3 [shape = 'f32[1,1]{1,0:T(1,128)S(6)}', space=smem, size = 0x200, scoped, tag = 'scoped memory for siam_forward.1']
  %s0 = inlined_call_operand.<no memory space> [shape: f32[1,1], index: 0, kind: input, shape index: {}]
  %s1 = inlined_call_operand.vmem [shape: bf16[8,1024], index: 1, kind: input, shape index: {}]
  %s2 = inlined_call_operand.vmem [shape: bf16[1024,32], index: 2, kind: input, shape index: {}]
  %s3 = inlined_call_operand.vmem [shape: f32[1,32], index: 3, kind: input, shape index: {}]
  %s4 = inlined_call_operand.vmem [shape: bf16[32,32], index: 4, kind: input, shape index: {}]
  %s5 = inlined_call_operand.vmem [shape: f32[1,32], index: 5, kind: input, shape index: {}]
  %s6 = inlined_call_operand.vmem [shape: f32[8,32], index: 6, kind: output, shape index: {0}]
  %s7 = inlined_call_operand.vmem [shape: f32[8,32], index: 7, kind: output, shape index: {1}]
  %8 = xla_tuple %s6, %s7
  %s9 = sld [smem:[#allocation0]]
  $region50: #{siam_forward.1} parent=0
    _
  %s11 = ssub.s32 1, %s9
  %s12 = scalar_select 0, %s11, %s9
  %13 = sst [smem:[#allocation3]] %s0
  // Predicated region
  $region2: #{siam_forward.1} parent=0 // pred_check
    _
  $region3: #{siam_forward.1} parent=0 // pred_check_branch
    %15 = sbr.rel (0) target = $region5
  $region4: #{siam_forward.1} parent=0 // pred_region
    _
  $region5: #{siam_forward.1} parent=0 // pred_fallthru
    _
  // Predicated region
  $region6: #{siam_forward.1} parent=0 // pred_check
    _
  $region7: #{siam_forward.1} parent=0 // pred_check_branch
    %17 = sbr.rel (0) target = $region9
  $region8: #{siam_forward.1} parent=0 // pred_region
    _
  $region9: #{siam_forward.1} parent=0 // pred_fallthru
    _
  // Predicated region
  $region10: #{siam_forward.1} parent=0 // pred_check
    _
  $region11: #{siam_forward.1} parent=0 // pred_check_branch
    %19 = sbr.rel (0) target = $region13
  $region12: #{siam_forward.1} parent=0 // pred_region
    _
  $region13: #{siam_forward.1} parent=0 // pred_fallthru
    _
  // Predicated region
  $region14: #{siam_forward.1} parent=0 // pred_check
    _
  $region15: #{siam_forward.1} parent=0 // pred_check_branch
    %21 = sbr.rel (0) target = $region17
  $region16: #{siam_forward.1} parent=0 // pred_region
    _
  $region17: #{siam_forward.1} parent=0 // pred_fallthru
    _
  // Predicated region
  $region18: #{siam_forward.1} parent=0 // pred_check
    _
  $region19: #{siam_forward.1} parent=0 // pred_check_branch
    %23 = sbr.rel (0) target = $region21
  $region20: #{siam_forward.1} parent=0 // pred_region
    _
  $region21: #{siam_forward.1} parent=0 // pred_fallthru
    _
  // Predicated region
  $region22: #{siam_forward.1} parent=0 // pred_check
    _
  $region23: #{siam_forward.1} parent=0 // pred_check_branch
    %25 = sbr.rel (0) target = $region25
  $region24: #{siam_forward.1} parent=0 // pred_region
    _
  $region25: #{siam_forward.1} parent=0 // pred_fallthru
    _
  %p27 = scmp.eq.s32.totalorder 0, 0
  // Predicated region
  $region26: #{siam_forward.1} parent=0 // pred_check
    %p28 = pneg %p27
  $region27: #{siam_forward.1} parent=0 // pred_check_branch
    %30 = sbr.rel (%p28) target = $region29
  $region28: #{siam_forward.1} parent=0 // pred_region
    %vm31 = vcmask 261120
    %32 = vst.msk [vmem:[#allocation2] sm:$0xff] %vm31, 0.0
  $region29: #{siam_forward.1} parent=0 // pred_fallthru
    _
  %v33 = vld [vmem:[#allocation2] sm:$0xff]
  %v34 = vld [vmem:[%s1] sm:$0xff]
  %v35 = vld [vmem:[%s1 + $0x8] sm:$0xff]
  %v36 = vld [vmem:[%s1 + $0x10] sm:$0xff]
  %v37 = vld [vmem:[%s1 + $0x18] sm:$0xff]
  %v38 = vld [vmem:[%s2] sm:$0xf]
  %v39 = vld [vmem:[%s2 + $0x4] sm:$0xf]
  %v40 = vld [vmem:[%s2 + $0x8] sm:$0xf]
  %v41 = vld [vmem:[%s2 + $0xc] sm:$0xf]
  %v42 = vld [vmem:[%s2 + $0x10] sm:$0xf]
  %v43 = vld [vmem:[%s2 + $0x14] sm:$0xf]
  %v44 = vld [vmem:[%s2 + $0x18] sm:$0xf]
  %v45 = vld [vmem:[%s2 + $0x1c] sm:$0xf]
  %v46 = vld [vmem:[%s2 + $0x20] sm:$0xf]
  %v47 = vld [vmem:[%s2 + $0x24] sm:$0xf]
  %v48 = vld [vmem:[%s2 + $0x28] sm:$0xf]
  %v49 = vld [vmem:[%s2 + $0x2c] sm:$0xf]
  %v50 = vld [vmem:[%s2 + $0x30] sm:$0xf]
  %v51 = vld [vmem:[%s2 + $0x34] sm:$0xf]
  %v52 = vld [vmem:[%s2 + $0x38] sm:$0xf]
  %v53 = vld [vmem:[%s2 + $0x3c] sm:$0xf]
  %v54 = vld [vmem:[%s2 + $0x40] sm:$0xf]
  %v55 = vld [vmem:[%s2 + $0x44] sm:$0xf]
  %v56 = vld [vmem:[%s2 + $0x48] sm:$0xf]
  %v57 = vld [vmem:[%s2 + $0x4c] sm:$0xf]
  %v58 = vld [vmem:[%s2 + $0x50] sm:$0xf]
  %v59 = vld [vmem:[%s2 + $0x54] sm:$0xf]
  %v60 = vld [vmem:[%s2 + $0x58] sm:$0xf]
  %v61 = vld [vmem:[%s2 + $0x5c] sm:$0xf]
  %v62 = vld [vmem:[%s2 + $0x60] sm:$0xf]
  %v63 = vld [vmem:[%s2 + $0x64] sm:$0xf]
  %v64 = vld [vmem:[%s2 + $0x68] sm:$0xf]
  %v65 = vld [vmem:[%s2 + $0x6c] sm:$0xf]
  %v66 = vld [vmem:[%s2 + $0x70] sm:$0xf]
  %v67 = vld [vmem:[%s2 + $0x74] sm:$0xf]
  %v68 = vld [vmem:[%s2 + $0x78] sm:$0xf]
  %v69 = vld [vmem:[%s2 + $0x7c] sm:$0xf]
  %v70 = vld [vmem:[%s2 + $0x80] sm:$0xf]
  %v71 = vld [vmem:[%s2 + $0x84] sm:$0xf]
  %v72 = vld [vmem:[%s2 + $0x88] sm:$0xf]
  %v73 = vld [vmem:[%s2 + $0x8c] sm:$0xf]
  %v74 = vld [vmem:[%s2 + $0x90] sm:$0xf]
  %v75 = vld [vmem:[%s2 + $0x94] sm:$0xf]
  %v76 = vld [vmem:[%s2 + $0x98] sm:$0xf]
  %v77 = vld [vmem:[%s2 + $0x9c] sm:$0xf]
  %v78 = vld [vmem:[%s2 + $0xa0] sm:$0xf]
  %v79 = vld [vmem:[%s2 + $0xa4] sm:$0xf]
  %v80 = vld [vmem:[%s2 + $0xa8] sm:$0xf]
  %v81 = vld [vmem:[%s2 + $0xac] sm:$0xf]
  %v82 = vld [vmem:[%s2 + $0xb0] sm:$0xf]
  %v83 = vld [vmem:[%s2 + $0xb4] sm:$0xf]
  %v84 = vld [vmem:[%s2 + $0xb8] sm:$0xf]
  %v85 = vld [vmem:[%s2 + $0xbc] sm:$0xf]
  %v86 = vld [vmem:[%s2 + $0xc0] sm:$0xf]
  %v87 = vld [vmem:[%s2 + $0xc4] sm:$0xf]
  %v88 = vld [vmem:[%s2 + $0xc8] sm:$0xf]
  %v89 = vld [vmem:[%s2 + $0xcc] sm:$0xf]
  %v90 = vld [vmem:[%s2 + $0xd0] sm:$0xf]
  %v91 = vld [vmem:[%s2 + $0xd4] sm:$0xf]
  %v92 = vld [vmem:[%s2 + $0xd8] sm:$0xf]
  %v93 = vld [vmem:[%s2 + $0xdc] sm:$0xf]
  %v94 = vld [vmem:[%s2 + $0xe0] sm:$0xf]
  %v95 = vld [vmem:[%s2 + $0xe4] sm:$0xf]
  %v96 = vld [vmem:[%s2 + $0xe8] sm:$0xf]
  %v97 = vld [vmem:[%s2 + $0xec] sm:$0xf]
  %v98 = vld [vmem:[%s2 + $0xf0] sm:$0xf]
  %v99 = vld [vmem:[%s2 + $0xf4] sm:$0xf]
  %v100 = vld [vmem:[%s2 + $0xf8] sm:$0xf]
  %v101 = vld [vmem:[%s2 + $0xfc] sm:$0xf]
  %v102 = vld [vmem:[%s2 + $0x100] sm:$0xf]
  %v103 = vld [vmem:[%s2 + $0x104] sm:$0xf]
  %v104 = vld [vmem:[%s2 + $0x108] sm:$0xf]
  %v105 = vld [vmem:[%s2 + $0x10c] sm:$0xf]
  %v106 = vld [vmem:[%s2 + $0x110] sm:$0xf]
  %v107 = vld [vmem:[%s2 + $0x114] sm:$0xf]
  %v108 = vld [vmem:[%s2 + $0x118] sm:$0xf]
  %v109 = vld [vmem:[%s2 + $0x11c] sm:$0xf]
  %v110 = vld [vmem:[%s2 + $0x120] sm:$0xf]
  %v111 = vld [vmem:[%s2 + $0x124] sm:$0xf]
  %v112 = vld [vmem:[%s2 + $0x128] sm:$0xf]
  %v113 = vld [vmem:[%s2 + $0x12c] sm:$0xf]
  %v114 = vld [vmem:[%s2 + $0x130] sm:$0xf]
  %v115 = vld [vmem:[%s2 + $0x134] sm:$0xf]
  %v116 = vld [vmem:[%s2 + $0x138] sm:$0xf]
  %v117 = vld [vmem:[%s2 + $0x13c] sm:$0xf]
  %v118 = vld [vmem:[%s2 + $0x140] sm:$0xf]
  %v119 = vld [vmem:[%s2 + $0x144] sm:$0xf]
  %v120 = vld [vmem:[%s2 + $0x148] sm:$0xf]
  %v121 = vld [vmem:[%s2 + $0x14c] sm:$0xf]
  %v122 = vld [vmem:[%s2 + $0x150] sm:$0xf]
  %v123 = vld [vmem:[%s2 + $0x154] sm:$0xf]
  %v124 = vld [vmem:[%s2 + $0x158] sm:$0xf]
  %v125 = vld [vmem:[%s2 + $0x15c] sm:$0xf]
  %v126 = vld [vmem:[%s2 + $0x160] sm:$0xf]
  %v127 = vld [vmem:[%s2 + $0x164] sm:$0xf]
  %v128 = vld [vmem:[%s2 + $0x168] sm:$0xf]
  %v129 = vld [vmem:[%s2 + $0x16c] sm:$0xf]
  %v130 = vld [vmem:[%s2 + $0x170] sm:$0xf]
  %v131 = vld [vmem:[%s2 + $0x174] sm:$0xf]
  %v132 = vld [vmem:[%s2 + $0x178] sm:$0xf]
  %v133 = vld [vmem:[%s2 + $0x17c] sm:$0xf]
  %v134 = vld [vmem:[%s2 + $0x180] sm:$0xf]
  %v135 = vld [vmem:[%s2 + $0x184] sm:$0xf]
  %v136 = vld [vmem:[%s2 + $0x188] sm:$0xf]
  %v137 = vld [vmem:[%s2 + $0x18c] sm:$0xf]
  %v138 = vld [vmem:[%s2 + $0x190] sm:$0xf]
  %v139 = vld [vmem:[%s2 + $0x194] sm:$0xf]
  %v140 = vld [vmem:[%s2 + $0x198] sm:$0xf]
  %v141 = vld [vmem:[%s2 + $0x19c] sm:$0xf]
  %v142 = vld [vmem:[%s2 + $0x1a0] sm:$0xf]
  %v143 = vld [vmem:[%s2 + $0x1a4] sm:$0xf]
  %v144 = vld [vmem:[%s2 + $0x1a8] sm:$0xf]
  %v145 = vld [vmem:[%s2 + $0x1ac] sm:$0xf]
  %v146 = vld [vmem:[%s2 + $0x1b0] sm:$0xf]
  %v147 = vld [vmem:[%s2 + $0x1b4] sm:$0xf]
  %v148 = vld [vmem:[%s2 + $0x1b8] sm:$0xf]
  %v149 = vld [vmem:[%s2 + $0x1bc] sm:$0xf]
  %v150 = vld [vmem:[%s2 + $0x1c0] sm:$0xf]
  %v151 = vld [vmem:[%s2 + $0x1c4] sm:$0xf]
  %v152 = vld [vmem:[%s2 + $0x1c8] sm:$0xf]
  %v153 = vld [vmem:[%s2 + $0x1cc] sm:$0xf]
  %v154 = vld [vmem:[%s2 + $0x1d0] sm:$0xf]
  %v155 = vld [vmem:[%s2 + $0x1d4] sm:$0xf]
  %v156 = vld [vmem:[%s2 + $0x1d8] sm:$0xf]
  %v157 = vld [vmem:[%s2 + $0x1dc] sm:$0xf]
  %v158 = vld [vmem:[%s2 + $0x1e0] sm:$0xf]
  %v159 = vld [vmem:[%s2 + $0x1e4] sm:$0xf]
  %v160 = vld [vmem:[%s2 + $0x1e8] sm:$0xf]
  %v161 = vld [vmem:[%s2 + $0x1ec] sm:$0xf]
  %v162 = vld [vmem:[%s2 + $0x1f0] sm:$0xf]
  %v163 = vld [vmem:[%s2 + $0x1f4] sm:$0xf]
  %v164 = vld [vmem:[%s2 + $0x1f8] sm:$0xf]
  %v165 = vld [vmem:[%s2 + $0x1fc] sm:$0xf]
  %v170 = vunpack.c.l.b16 %v34
  %v171 = vunpack.c.h.b16 %v34
  %v172 = vunpack.c.l.b16 %v35
  %v173 = vunpack.c.h.b16 %v35
  %v174 = vunpack.c.l.b16 %v36
  %v175 = vunpack.c.h.b16 %v36
  %v176 = vunpack.c.l.b16 %v37
  %v177 = vunpack.c.h.b16 %v37
  %v178 = vpack.c.b16 %v170, %v170
  %v179 = vpack.c.b16 %v171, %v171
  %v180 = vpack.c.b16 %v172, %v172
  %v181 = vpack.c.b16 %v173, %v173
  %v182 = vpack.c.b16 %v174, %v174
  %v183 = vpack.c.b16 %v175, %v175
  %v184 = vpack.c.b16 %v176, %v176
  %v185 = vpack.c.b16 %v177, %v177
  %v322 = vunpack.c.l.b16 %v38
  %v323 = vunpack.c.l.b16 %v39
  %v324 = vunpack.c.l.b16 %v40
  %v325 = vunpack.c.l.b16 %v41
  %v326 = vunpack.c.l.b16 %v42
  %v327 = vunpack.c.l.b16 %v43
  %v328 = vunpack.c.l.b16 %v44
  %v329 = vunpack.c.l.b16 %v45
  %v330 = vunpack.c.l.b16 %v46
  %v331 = vunpack.c.l.b16 %v47
  %v332 = vunpack.c.l.b16 %v48
  %v333 = vunpack.c.l.b16 %v49
  %v334 = vunpack.c.l.b16 %v50
  %v335 = vunpack.c.l.b16 %v51
  %v336 = vunpack.c.l.b16 %v52
  %v337 = vunpack.c.l.b16 %v53
  %v338 = vunpack.c.l.b16 %v54
  %v339 = vunpack.c.l.b16 %v55
  %v340 = vunpack.c.l.b16 %v56
  %v341 = vunpack.c.l.b16 %v57
  %v342 = vunpack.c.l.b16 %v58
  %v343 = vunpack.c.l.b16 %v59
  %v344 = vunpack.c.l.b16 %v60
  %v345 = vunpack.c.l.b16 %v61
  %v346 = vunpack.c.l.b16 %v62
  %v347 = vunpack.c.l.b16 %v63
  %v348 = vunpack.c.l.b16 %v64
  %v349 = vunpack.c.l.b16 %v65
  %v350 = vunpack.c.l.b16 %v66
  %v351 = vunpack.c.l.b16 %v67
  %v352 = vunpack.c.l.b16 %v68
  %v353 = vunpack.c.l.b16 %v69
  %v354 = vunpack.c.l.b16 %v70
  %v355 = vunpack.c.l.b16 %v71
  %v356 = vunpack.c.l.b16 %v72
  %v357 = vunpack.c.l.b16 %v73
  %v358 = vunpack.c.l.b16 %v74
  %v359 = vunpack.c.l.b16 %v75
  %v360 = vunpack.c.l.b16 %v76
  %v361 = vunpack.c.l.b16 %v77
  %v362 = vunpack.c.l.b16 %v78
  %v363 = vunpack.c.l.b16 %v79
  %v364 = vunpack.c.l.b16 %v80
  %v365 = vunpack.c.l.b16 %v81
  %v366 = vunpack.c.l.b16 %v82
  %v367 = vunpack.c.l.b16 %v83
  %v368 = vunpack.c.l.b16 %v84
  %v369 = vunpack.c.l.b16 %v85
  %v370 = vunpack.c.l.b16 %v86
  %v371 = vunpack.c.l.b16 %v87
  %v372 = vunpack.c.l.b16 %v88
  %v373 = vunpack.c.l.b16 %v89
  %v374 = vunpack.c.l.b16 %v90
  %v375 = vunpack.c.l.b16 %v91
  %v376 = vunpack.c.l.b16 %v92
  %v377 = vunpack.c.l.b16 %v93
  %v378 = vunpack.c.l.b16 %v94
  %v379 = vunpack.c.l.b16 %v95
  %v380 = vunpack.c.l.b16 %v96
  %v381 = vunpack.c.l.b16 %v97
  %v382 = vunpack.c.l.b16 %v98
  %v383 = vunpack.c.l.b16 %v99
  %v384 = vunpack.c.l.b16 %v100
  %v385 = vunpack.c.l.b16 %v101
  %v386 = vunpack.c.l.b16 %v102
  %v387 = vunpack.c.l.b16 %v103
  %v388 = vunpack.c.l.b16 %v104
  %v389 = vunpack.c.l.b16 %v105
  %v390 = vunpack.c.l.b16 %v106
  %v391 = vunpack.c.l.b16 %v107
  %v392 = vunpack.c.l.b16 %v108
  %v393 = vunpack.c.l.b16 %v109
  %v394 = vunpack.c.l.b16 %v110
  %v395 = vunpack.c.l.b16 %v111
  %v396 = vunpack.c.l.b16 %v112
  %v397 = vunpack.c.l.b16 %v113
  %v398 = vunpack.c.l.b16 %v114
  %v399 = vunpack.c.l.b16 %v115
  %v400 = vunpack.c.l.b16 %v116
  %v401 = vunpack.c.l.b16 %v117
  %v402 = vunpack.c.l.b16 %v118
  %v403 = vunpack.c.l.b16 %v119
  %v404 = vunpack.c.l.b16 %v120
  %v405 = vunpack.c.l.b16 %v121
  %v406 = vunpack.c.l.b16 %v122
  %v407 = vunpack.c.l.b16 %v123
  %v408 = vunpack.c.l.b16 %v124
  %v409 = vunpack.c.l.b16 %v125
  %v410 = vunpack.c.l.b16 %v126
  %v411 = vunpack.c.l.b16 %v127
  %v412 = vunpack.c.l.b16 %v128
  %v413 = vunpack.c.l.b16 %v129
  %v414 = vunpack.c.l.b16 %v130
  %v415 = vunpack.c.l.b16 %v131
  %v416 = vunpack.c.l.b16 %v132
  %v417 = vunpack.c.l.b16 %v133
  %v418 = vunpack.c.l.b16 %v134
  %v419 = vunpack.c.l.b16 %v135
  %v420 = vunpack.c.l.b16 %v136
  %v421 = vunpack.c.l.b16 %v137
  %v422 = vunpack.c.l.b16 %v138
  %v423 = vunpack.c.l.b16 %v139
  %v424 = vunpack.c.l.b16 %v140
  %v425 = vunpack.c.l.b16 %v141
  %v426 = vunpack.c.l.b16 %v142
  %v427 = vunpack.c.l.b16 %v143
  %v428 = vunpack.c.l.b16 %v144
  %v429 = vunpack.c.l.b16 %v145
  %v430 = vunpack.c.l.b16 %v146
  %v431 = vunpack.c.l.b16 %v147
  %v432 = vunpack.c.l.b16 %v148
  %v433 = vunpack.c.l.b16 %v149
  %v434 = vunpack.c.l.b16 %v150
  %v435 = vunpack.c.l.b16 %v151
  %v436 = vunpack.c.l.b16 %v152
  %v437 = vunpack.c.l.b16 %v153
  %v438 = vunpack.c.l.b16 %v154
  %v439 = vunpack.c.l.b16 %v155
  %v440 = vunpack.c.l.b16 %v156
  %v441 = vunpack.c.l.b16 %v157
  %v442 = vunpack.c.l.b16 %v158
  %v443 = vunpack.c.l.b16 %v159
  %v444 = vunpack.c.l.b16 %v160
  %v445 = vunpack.c.l.b16 %v161
  %v446 = vunpack.c.l.b16 %v162
  %v447 = vunpack.c.l.b16 %v163
  %v448 = vunpack.c.l.b16 %v164
  %v449 = vunpack.c.l.b16 %v165
  %v450 = vpack.c.b16 %v323, %v322
  %v451 = vpack.c.b16 %v325, %v324
  %v452 = vpack.c.b16 %v327, %v326
  %v453 = vpack.c.b16 %v329, %v328
  %v454 = vpack.c.b16 %v331, %v330
  %v455 = vpack.c.b16 %v333, %v332
  %v456 = vpack.c.b16 %v335, %v334
  %v457 = vpack.c.b16 %v337, %v336
  %v458 = vpack.c.b16 %v339, %v338
  %v459 = vpack.c.b16 %v341, %v340
  %v460 = vpack.c.b16 %v343, %v342
  %v461 = vpack.c.b16 %v345, %v344
  %v462 = vpack.c.b16 %v347, %v346
  %v463 = vpack.c.b16 %v349, %v348
  %v464 = vpack.c.b16 %v351, %v350
  %v465 = vpack.c.b16 %v353, %v352
  %v466 = vpack.c.b16 %v355, %v354
  %v467 = vpack.c.b16 %v357, %v356
  %v468 = vpack.c.b16 %v359, %v358
  %v469 = vpack.c.b16 %v361, %v360
  %v470 = vpack.c.b16 %v363, %v362
  %v471 = vpack.c.b16 %v365, %v364
  %v472 = vpack.c.b16 %v367, %v366
  %v473 = vpack.c.b16 %v369, %v368
  %v474 = vpack.c.b16 %v371, %v370
  %v475 = vpack.c.b16 %v373, %v372
  %v476 = vpack.c.b16 %v375, %v374
  %v477 = vpack.c.b16 %v377, %v376
  %v478 = vpack.c.b16 %v379, %v378
  %v479 = vpack.c.b16 %v381, %v380
  %v480 = vpack.c.b16 %v383, %v382
  %v481 = vpack.c.b16 %v385, %v384
  %v482 = vpack.c.b16 %v387, %v386
  %v483 = vpack.c.b16 %v389, %v388
  %v484 = vpack.c.b16 %v391, %v390
  %v485 = vpack.c.b16 %v393, %v392
  %v486 = vpack.c.b16 %v395, %v394
  %v487 = vpack.c.b16 %v397, %v396
  %v488 = vpack.c.b16 %v399, %v398
  %v489 = vpack.c.b16 %v401, %v400
  %v490 = vpack.c.b16 %v403, %v402
  %v491 = vpack.c.b16 %v405, %v404
  %v492 = vpack.c.b16 %v407, %v406
  %v493 = vpack.c.b16 %v409, %v408
  %v494 = vpack.c.b16 %v411, %v410
  %v495 = vpack.c.b16 %v413, %v412
  %v496 = vpack.c.b16 %v415, %v414
  %v497 = vpack.c.b16 %v417, %v416
  %v498 = vpack.c.b16 %v419, %v418
  %v499 = vpack.c.b16 %v421, %v420
  %v500 = vpack.c.b16 %v423, %v422
  %v501 = vpack.c.b16 %v425, %v424
  %v502 = vpack.c.b16 %v427, %v426
  %v503 = vpack.c.b16 %v429, %v428
  %v504 = vpack.c.b16 %v431, %v430
  %v505 = vpack.c.b16 %v433, %v432
  %v506 = vpack.c.b16 %v435, %v434
  %v507 = vpack.c.b16 %v437, %v436
  %v508 = vpack.c.b16 %v439, %v438
  %v509 = vpack.c.b16 %v441, %v440
  %v510 = vpack.c.b16 %v443, %v442
  %v511 = vpack.c.b16 %v445, %v444
  %v512 = vpack.c.b16 %v447, %v446
  %v513 = vpack.c.b16 %v449, %v448
  %578 = vmatpush.bf16.msra.mxu0 %v457
  %579 = vmatpush.bf16.msra.mxu0 %v456
  %580 = vmatpush.bf16.msra.mxu0 %v455
  %581 = vmatpush.bf16.msra.mxu0 %v454
  %582 = vmatpush.bf16.msra.mxu0 %v453
  %583 = vmatpush.bf16.msra.mxu0 %v452
  %584 = vmatpush.bf16.msra.mxu0 %v451
  %585 = vmatpush.bf16.msra.mxu0 %v450
  %586 = vmatmul.bf16.gmra.mxu0 %v178
  %v587 = vpop.f32.mrf.mxu0
  %v588 = vadd.f32 0.0, %v587
  %v589 = vpop.f32.mrf.mxu0
  %590 = vdwg.mxu0
  %591 = vmatpush.bf16.msra.mxu0 %v465
  %592 = vmatpush.bf16.msra.mxu0 %v464
  %593 = vmatpush.bf16.msra.mxu0 %v463
  %594 = vmatpush.bf16.msra.mxu0 %v462
  %595 = vmatpush.bf16.msra.mxu0 %v461
  %596 = vmatpush.bf16.msra.mxu0 %v460
  %597 = vmatpush.bf16.msra.mxu0 %v459
  %598 = vmatpush.bf16.msra.mxu0 %v458
  %599 = vmatmul.bf16.gmra.mxu0 %v179
  %v600 = vpop.f32.mrf.mxu0
  %v601 = vadd.f32 %v588, %v600
  %v602 = vpop.f32.mrf.mxu0
  %603 = vdwg.mxu0
  %604 = vmatpush.bf16.msra.mxu0 %v473
  %605 = vmatpush.bf16.msra.mxu0 %v472
  %606 = vmatpush.bf16.msra.mxu0 %v471
  %607 = vmatpush.bf16.msra.mxu0 %v470
  %608 = vmatpush.bf16.msra.mxu0 %v469
  %609 = vmatpush.bf16.msra.mxu0 %v468
  %610 = vmatpush.bf16.msra.mxu0 %v467
  %611 = vmatpush.bf16.msra.mxu0 %v466
  %612 = vmatmul.bf16.gmra.mxu0 %v180
  %v613 = vpop.f32.mrf.mxu0
  %v614 = vadd.f32 %v601, %v613
  %v615 = vpop.f32.mrf.mxu0
  %616 = vdwg.mxu0
  %617 = vmatpush.bf16.msra.mxu0 %v481
  %618 = vmatpush.bf16.msra.mxu0 %v480
  %619 = vmatpush.bf16.msra.mxu0 %v479
  %620 = vmatpush.bf16.msra.mxu0 %v478
  %621 = vmatpush.bf16.msra.mxu0 %v477
  %622 = vmatpush.bf16.msra.mxu0 %v476
  %623 = vmatpush.bf16.msra.mxu0 %v475
  %624 = vmatpush.bf16.msra.mxu0 %v474
  %625 = vmatmul.bf16.gmra.mxu0 %v181
  %v626 = vpop.f32.mrf.mxu0
  %v627 = vadd.f32 %v614, %v626
  %v628 = vpop.f32.mrf.mxu0
  %629 = vdwg.mxu0
  %630 = vmatpush.bf16.msra.mxu0 %v489
  %631 = vmatpush.bf16.msra.mxu0 %v488
  %632 = vmatpush.bf16.msra.mxu0 %v487
  %633 = vmatpush.bf16.msra.mxu0 %v486
  %634 = vmatpush.bf16.msra.mxu0 %v485
  %635 = vmatpush.bf16.msra.mxu0 %v484
  %636 = vmatpush.bf16.msra.mxu0 %v483
  %637 = vmatpush.bf16.msra.mxu0 %v482
  %638 = vmatmul.bf16.gmra.mxu0 %v182
  %v639 = vpop.f32.mrf.mxu0
  %v640 = vadd.f32 %v627, %v639
  %v641 = vpop.f32.mrf.mxu0
  %642 = vdwg.mxu0
  %643 = vmatpush.bf16.msra.mxu0 %v497
  %644 = vmatpush.bf16.msra.mxu0 %v496
  %645 = vmatpush.bf16.msra.mxu0 %v495
  %646 = vmatpush.bf16.msra.mxu0 %v494
  %647 = vmatpush.bf16.msra.mxu0 %v493
  %648 = vmatpush.bf16.msra.mxu0 %v492
  %649 = vmatpush.bf16.msra.mxu0 %v491
  %650 = vmatpush.bf16.msra.mxu0 %v490
  %651 = vmatmul.bf16.gmra.mxu0 %v183
  %v652 = vpop.f32.mrf.mxu0
  %v653 = vadd.f32 %v640, %v652
  %v654 = vpop.f32.mrf.mxu0
  %655 = vdwg.mxu0
  %656 = vmatpush.bf16.msra.mxu0 %v505
  %657 = vmatpush.bf16.msra.mxu0 %v504
  %658 = vmatpush.bf16.msra.mxu0 %v503
  %659 = vmatpush.bf16.msra.mxu0 %v502
  %660 = vmatpush.bf16.msra.mxu0 %v501
  %661 = vmatpush.bf16.msra.mxu0 %v500
  %662 = vmatpush.bf16.msra.mxu0 %v499
  %663 = vmatpush.bf16.msra.mxu0 %v498
  %664 = vmatmul.bf16.gmra.mxu0 %v184
  %v665 = vpop.f32.mrf.mxu0
  %v666 = vadd.f32 %v653, %v665
  %v667 = vpop.f32.mrf.mxu0
  %668 = vdwg.mxu0
  %669 = vmatpush.bf16.msra.mxu0 %v513
  %670 = vmatpush.bf16.msra.mxu0 %v512
  %671 = vmatpush.bf16.msra.mxu0 %v511
  %672 = vmatpush.bf16.msra.mxu0 %v510
  %673 = vmatpush.bf16.msra.mxu0 %v509
  %674 = vmatpush.bf16.msra.mxu0 %v508
  %675 = vmatpush.bf16.msra.mxu0 %v507
  %676 = vmatpush.bf16.msra.mxu0 %v506
  %677 = vmatmul.bf16.gmra.mxu0 %v185
  %v678 = vpop.f32.mrf.mxu0
  %v679 = vadd.f32 %v666, %v678
  %v680 = vpop.f32.mrf.mxu0
  %681 = vdwg.mxu0
  %v682 = vadd.f32 %v33, %v679
  %vm683 = vcmask 261120
  %684 = vst.msk [vmem:[#allocation2] sm:$0xff] %vm683, %v682
  // Predicated region
  $region30: #{siam_forward.1} parent=0 // pred_check
    %p685 = pneg %p27
  $region31: #{siam_forward.1} parent=0 // pred_check_branch
    %687 = sbr.rel (%p685) target = $region33
  $region32: #{siam_forward.1} parent=0 // pred_region
    %s688 = sld [smem:[#allocation3]]
    %v689 = vld [vmem:[#allocation2] sm:$0xff]
    %v690 = vld [vmem:[%s3] sm:$0x1]
    %v692 = vperm.slane %v690, 0
    %v694 = vadd.f32 %v689, %v692
    %v695 = vmax.f32 %v694, 0.0
    %696 = vst.msk [vmem:[%s6] sm:$0xff] %vm683, %v695
    %v697 = vpack.c.bf16 %v695, %v695
    %v698 = vld [vmem:[%s4] sm:$0xf]
    %v699 = vld [vmem:[%s4 + $0x4] sm:$0xf]
    %v700 = vld [vmem:[%s4 + $0x8] sm:$0xf]
    %v701 = vld [vmem:[%s4 + $0xc] sm:$0xf]
    %v702 = vld [vmem:[%s5] sm:$0x1]
    %v704 = vperm.slane %v702, 0
    %v710 = vunpack.c.l.b16 %v698
    %v711 = vunpack.c.l.b16 %v699
    %v712 = vunpack.c.l.b16 %v700
    %v713 = vunpack.c.l.b16 %v701
    %v714 = vpack.c.b16 %v711, %v710
    %v715 = vpack.c.b16 %v713, %v712
    %v719 = vsel %vm683, %v697, 0
    %721 = vmatpush.bf16.msra.mxu0 0
    %722 = vmatpush.bf16.msra.mxu0 0
    %723 = vmatpush.bf16.msra.mxu0 0
    %724 = vmatpush.bf16.msra.mxu0 0
    %725 = vmatpush.bf16.msra.mxu0 0
    %726 = vmatpush.bf16.msra.mxu0 0
    %727 = vmatpush.bf16.msra.mxu0 %v715
    %728 = vmatpush.bf16.msra.mxu0 %v714
    %729 = vmatmul.bf16.gmra.mxu0 %v719
    %v730 = vpop.f32.mrf.mxu0
    %v731 = vadd.f32 %v704, %v730
    %v732 = vpop.f32.mrf.mxu0
    %733 = vdwg.mxu0
    %v734 = vmul.f32 %v731, %v731
    %v735 = vsel %vm683, %v734, 0.0
    %736 = vadd.xlane.f32.xlu0 %v735
    %v737 = vpop.xlane.xlu0 %736
    %v738 = vmax.f32 %v737, 1e-24
    %v739 = vrsqrt.pop %v738
    %v740 = vmul.f32 %v739, %v738
    %v741 = vmul.f32 %v740, %v739
    %v742 = vmul.f32 0.5, %v741
    %v743 = vsub.f32 1.5, %v742
    %v744 = vmul.f32 %v739, %v743
    %vm745 = vweird.f32 %v738
    %vm746 = vweird.f32 %v739
    %vm747 = vmor %vm745, %vm746
    %v748 = vsel %vm747, %v739, %v744
    %s749 = smul.f32 %s688, %s688
    %v750 = vstv %s749
    %vm751 = vcmp.lt.f32.partialorder %v737, %v750
    %v752 = vstv %s688
    %v753 = vmul.f32 %v752, %v731
    %v754 = vmul.f32 %v753, %v748
    %v755 = vsel %vm751, 1, 0
    %vm756 = vcmp.eq.s32.totalorder %v755, 1
    %v757 = vsel %vm756, %v731, %v754
    %758 = vst.msk [vmem:[%s7] sm:$0xff] %vm683, %v757
  $region33: #{siam_forward.1} parent=0 // pred_fallthru
    _
  // Predicated region
  $region34: #{siam_forward.1} parent=0 // pred_check
    _
  $region35: #{siam_forward.1} parent=0 // pred_check_branch
    %760 = sbr.rel (0) target = $region37
  $region36: #{siam_forward.1} parent=0 // pred_region
    _
  $region37: #{siam_forward.1} parent=0 // pred_fallthru
    _
  // Predicated region
  $region38: #{siam_forward.1} parent=0 // pred_check
    _
  $region39: #{siam_forward.1} parent=0 // pred_check_branch
    %762 = sbr.rel (0) target = $region41
  $region40: #{siam_forward.1} parent=0 // pred_region
    _
  $region41: #{siam_forward.1} parent=0 // pred_fallthru
    _
  // Predicated region
  $region42: #{siam_forward.1} parent=0 // pred_check
    _
  $region43: #{siam_forward.1} parent=0 // pred_check_branch
    %764 = sbr.rel (0) target = $region45
  $region44: #{siam_forward.1} parent=0 // pred_region
    _
  $region45: #{siam_forward.1} parent=0 // pred_fallthru
    _
  // Predicated region
  $region46: #{siam_forward.1} parent=0 // pred_check
    _
  $region47: #{siam_forward.1} parent=0 // pred_check_branch
    %766 = sbr.rel (0) target = $region49
  $region48: #{siam_forward.1} parent=0 // pred_region
    _
  $region49: #{siam_forward.1} parent=0 // pred_fallthru
    _

</llo_original>
